<compile_context>
chip_gen: v5e
topology: v5e:2x2
jax: 0.10.0
libtpu: 0.0.40
codegen_flags: <defaults>
</compile_context>

<pallas_src>
import jax
import jax.numpy as jnp
from jax.experimental import pallas as pl
from jax.experimental.pallas import tpu as pltpu


def _conv_dropout_kernel(C_in, C_out, H, W, KH, KW, threshold):
    HW = H * W
    Ho, Wo = H - KH + 1, W - KW + 1
    L = (Ho - 1) * W + Wo          # contiguous run holding all valid outputs

    def kernel(seed_ref, x_ref, w_ref, b_ref, o_ref):
        x = x_ref[...].astype(jnp.float32)                  # (C_in, HW)

        # --- convolution: KH*KW shifted-slab matmuls ------------------------
        acc = jnp.zeros((C_out, L), jnp.float32)
        for kh in range(KH):
            for kw in range(KW):
                d = kh * W + kw
                xs = x[:, d:d + L]                          # (C_in, L), static
                wk = w_ref[kh * KW + kw]                    # (C_out, C_in)
                acc = acc + jnp.dot(wk, xs,
                                    preferred_element_type=jnp.float32)
        y = acc + b_ref[...]                                # bias (C_out, 1)

        # --- MC dropout: keep iff hash_bits >= threshold (prob = 1 - p) -----
        seed = seed_ref[0].astype(jnp.uint32)
        base = (pl.program_id(0) * (C_out * HW)).astype(jnp.uint32)
        row = jax.lax.broadcasted_iota(jnp.uint32, (C_out, L), 0)
        col = jax.lax.broadcasted_iota(jnp.uint32, (C_out, L), 1)
        h = base + row * jnp.uint32(HW) + col
        h = h ^ (seed * jnp.uint32(0x9E3779B9))
        h = (h ^ jax.lax.shift_right_logical(h, jnp.uint32(16))) * jnp.uint32(0x7FEB352D)
        h = (h ^ jax.lax.shift_right_logical(h, jnp.uint32(15))) * jnp.uint32(0x846CA68B)
        h = h ^ jax.lax.shift_right_logical(h, jnp.uint32(16))
        keep = h >= jnp.uint32(threshold)
        y = jnp.where(keep, y, 0.0)

        # --- store: valid run + zero-fill the discarded tail columns --------
        o_ref[:, :L] = y.astype(o_ref.dtype)
        if L < HW:
            o_ref[:, L:] = jnp.zeros((C_out, HW - L), o_ref.dtype)

    return kernel


def dropout_conv2d(x, weight, bias, seed, *, dropout_rate=0.1):
    """x: (N, C_in, H, W) f32; weight: (C_out, C_in, KH, KW); bias: (C_out,)."""
    N, C_in, H, W = x.shape
    C_out, C_in_w, KH, KW = weight.shape
    assert C_in_w == C_in
    Ho, Wo = H - KH + 1, W - KW + 1
    HW = H * W

    # NCHW kept as-is; only free/cheap reshapes here (no transposes of x/out).
    x2 = x.reshape(N, C_in, HW)
    # weight -> (KH*KW, C_out, C_in): tiny tensor, negligible XLA cost.
    w3 = jnp.transpose(weight, (2, 3, 0, 1)).reshape(KH * KW, C_out, C_in)
    w3 = w3.astype(jnp.float32)
    b2 = bias.reshape(C_out, 1).astype(jnp.float32)
    seed_arr = jnp.asarray([seed], dtype=jnp.int32)

    threshold = min(max(int(round(dropout_rate * (2 ** 32))), 0), 2 ** 32 - 1)

    cost = pl.CostEstimate(
        flops=2 * N * C_out * C_in * KH * KW * Ho * Wo,
        transcendentals=0,
        bytes_accessed=4 * (N * C_in * HW + N * C_out * HW
                            + KH * KW * C_out * C_in + C_out),
    )

    out_full = pl.pallas_call(
        _conv_dropout_kernel(C_in, C_out, H, W, KH, KW, threshold),
        out_shape=jax.ShapeDtypeStruct((N, C_out, HW), x.dtype),
        grid_spec=pltpu.PrefetchScalarGridSpec(
            num_scalar_prefetch=1,                 # seed lands in SMEM
            grid=(N,),
            in_specs=[
                pl.BlockSpec((None, C_in, HW), lambda n, s: (n, 0, 0)),
                pl.BlockSpec((KH * KW, C_out, C_in), lambda n, s: (0, 0, 0)),
                pl.BlockSpec((C_out, 1), lambda n, s: (0, 0)),
            ],
            out_specs=pl.BlockSpec((None, C_out, HW), lambda n, s: (n, 0, 0)),
        ),
        compiler_params=pltpu.CompilerParams(
            dimension_semantics=("parallel",),
        ),
        cost_estimate=cost,
    )(seed_arr, x2, w3, b2)

    # (N, C_out, H*W) -> (N, C_out, H, W) -> drop wrap columns -> (N,C_out,Ho,Wo)
    return out_full.reshape(N, C_out, H, W)[:, :, :Ho, :Wo]


if __name__ == "__main__":
    key = jax.random.PRNGKey(0)
    k_x, k_w, k_b = jax.random.split(key, 3)

    N, C_in, H, W = 2, 4, 16, 16
    C_out, KH, KW = 8, 3, 3
    dropout_rate = 0.1

    # He-style init exactly as the module's __init__ (normal(0, k)).
    k_std = (1.0 / (C_in * KH * KW)) ** 0.5
    x = jax.random.normal(k_x, (N, C_in, H, W), dtype=jnp.float32)
    weight = k_std * jax.random.normal(k_w, (C_out, C_in, KH, KW), dtype=jnp.float32)
    bias = k_std * jax.random.normal(k_b, (C_out,), dtype=jnp.float32)

    out = dropout_conv2d(x, weight, bias, seed=1234, dropout_rate=dropout_rate)
    out = jax.block_until_ready(out)

    Ho, Wo = H - KH + 1, W - KW + 1
    assert out.shape == (N, C_out, Ho, Wo) and out.dtype == x.dtype

    # Reference conv (VALID, NCHW). Surviving elements must match it; dropped
    # elements are exactly 0.
    y_ref = jax.lax.conv_general_dilated(
        x, weight, window_strides=(1, 1), padding="VALID",
        dimension_numbers=("NCHW", "OIHW", "NCHW"),
    ) + bias.reshape(1, C_out, 1, 1)

    ok = jnp.all(jnp.isclose(out, y_ref, rtol=2e-2, atol=2e-2) | (out == 0.0))
    assert bool(ok), "kernel output inconsistent with conv2d reference"

    n_zero = int(jnp.sum(out == 0.0))
    assert 0 < n_zero < out.size, "dropout mask looks degenerate"

    print("KERNEL_OK")
</pallas_src>

<mosaic_0001>
module attributes {stable_mosaic.version = 11 : i64} {
  func.func @kernel(%arg0: i32, %arg1: memref<1xi32, #tpu.memory_space<smem>>, %arg2: memref<1x4x256xf32, #tpu.memory_space<vmem>>, %arg3: memref<9x8x4xf32, #tpu.memory_space<vmem>>, %arg4: memref<8x1xf32, #tpu.memory_space<vmem>>, %arg5: memref<1x8x256xf32, #tpu.memory_space<vmem>>) attributes {dimension_semantics = [#tpu.dimension_semantics<parallel>], iteration_bounds = array<i64: 2>, scalar_prefetch = 1 : i64, scratch_operands = 0 : i64, tpu.core_type = #tpu.core_type<tc>, window_params = [{transform_indices = @transform_0, window_bounds = array<i64: 1, 4, 256>}, {pipeline_mode = #tpu.pipeline_mode<synchronous>, transform_indices = @transform_1, window_bounds = array<i64: 9, 8, 4>}, {pipeline_mode = #tpu.pipeline_mode<synchronous>, transform_indices = @transform_2, window_bounds = array<i64: 8, 1>}, {transform_indices = @transform_3, window_bounds = array<i64: 1, 8, 256>}]} {
    %c0 = arith.constant 0 : index
    %c0_0 = arith.constant 0 : index
    %c0_1 = arith.constant 0 : index
    %0 = vector.load %arg2[%c0, %c0_0, %c0_1] : memref<1x4x256xf32, #tpu.memory_space<vmem>>, vector<1x4x256xf32>
    %1 = vector.shape_cast %0 : vector<1x4x256xf32> to vector<4x256xf32>
    %cst = arith.constant 0.000000e+00 : f32
    %2 = vector.broadcast %cst : f32 to vector<8x222xf32>
    %3 = vector.extract_strided_slice %1 {offsets = [0, 0], sizes = [4, 222], strides = [1, 1]} : vector<4x256xf32> to vector<4x222xf32>
    %c0_2 = arith.constant 0 : index
    %c0_3 = arith.constant 0 : index
    %c0_4 = arith.constant 0 : index
    %4 = vector.load %arg3[%c0_2, %c0_3, %c0_4] : memref<9x8x4xf32, #tpu.memory_space<vmem>>, vector<1x8x4xf32>
    %5 = vector.shape_cast %4 : vector<1x8x4xf32> to vector<8x4xf32>
    %cst_5 = arith.constant dense<0.000000e+00> : vector<8x222xf32>
    %6 = tpu.matmul %5, %3, %cst_5 {dimension_numbers = #tpu.dot_dimension_numbers<[1], [0], [0], [1], [0, 0, 1, 1], [], []>} : vector<8x4xf32>, vector<4x222xf32>, vector<8x222xf32> -> vector<8x222xf32>
    %7 = arith.addf %2, %6 : vector<8x222xf32>
    %8 = vector.extract_strided_slice %1 {offsets = [0, 1], sizes = [4, 222], strides = [1, 1]} : vector<4x256xf32> to vector<4x222xf32>
    %c1 = arith.constant 1 : index
    %c0_6 = arith.constant 0 : index
    %c0_7 = arith.constant 0 : index
    %9 = vector.load %arg3[%c1, %c0_6, %c0_7] : memref<9x8x4xf32, #tpu.memory_space<vmem>>, vector<1x8x4xf32>
    %10 = vector.shape_cast %9 : vector<1x8x4xf32> to vector<8x4xf32>
    %cst_8 = arith.constant dense<0.000000e+00> : vector<8x222xf32>
    %11 = tpu.matmul %10, %8, %cst_8 {dimension_numbers = #tpu.dot_dimension_numbers<[1], [0], [0], [1], [0, 0, 1, 1], [], []>} : vector<8x4xf32>, vector<4x222xf32>, vector<8x222xf32> -> vector<8x222xf32>
    %12 = arith.addf %7, %11 : vector<8x222xf32>
    %13 = vector.extract_strided_slice %1 {offsets = [0, 2], sizes = [4, 222], strides = [1, 1]} : vector<4x256xf32> to vector<4x222xf32>
    %c2 = arith.constant 2 : index
    %c0_9 = arith.constant 0 : index
    %c0_10 = arith.constant 0 : index
    %14 = vector.load %arg3[%c2, %c0_9, %c0_10] : memref<9x8x4xf32, #tpu.memory_space<vmem>>, vector<1x8x4xf32>
    %15 = vector.shape_cast %14 : vector<1x8x4xf32> to vector<8x4xf32>
    %cst_11 = arith.constant dense<0.000000e+00> : vector<8x222xf32>
    %16 = tpu.matmul %15, %13, %cst_11 {dimension_numbers = #tpu.dot_dimension_numbers<[1], [0], [0], [1], [0, 0, 1, 1], [], []>} : vector<8x4xf32>, vector<4x222xf32>, vector<8x222xf32> -> vector<8x222xf32>
    %17 = arith.addf %12, %16 : vector<8x222xf32>
    %18 = vector.extract_strided_slice %1 {offsets = [0, 16], sizes = [4, 222], strides = [1, 1]} : vector<4x256xf32> to vector<4x222xf32>
    %c3 = arith.constant 3 : index
    %c0_12 = arith.constant 0 : index
    %c0_13 = arith.constant 0 : index
    %19 = vector.load %arg3[%c3, %c0_12, %c0_13] : memref<9x8x4xf32, #tpu.memory_space<vmem>>, vector<1x8x4xf32>
    %20 = vector.shape_cast %19 : vector<1x8x4xf32> to vector<8x4xf32>
    %cst_14 = arith.constant dense<0.000000e+00> : vector<8x222xf32>
    %21 = tpu.matmul %20, %18, %cst_14 {dimension_numbers = #tpu.dot_dimension_numbers<[1], [0], [0], [1], [0, 0, 1, 1], [], []>} : vector<8x4xf32>, vector<4x222xf32>, vector<8x222xf32> -> vector<8x222xf32>
    %22 = arith.addf %17, %21 : vector<8x222xf32>
    %23 = vector.extract_strided_slice %1 {offsets = [0, 17], sizes = [4, 222], strides = [1, 1]} : vector<4x256xf32> to vector<4x222xf32>
    %c4 = arith.constant 4 : index
    %c0_15 = arith.constant 0 : index
    %c0_16 = arith.constant 0 : index
    %24 = vector.load %arg3[%c4, %c0_15, %c0_16] : memref<9x8x4xf32, #tpu.memory_space<vmem>>, vector<1x8x4xf32>
    %25 = vector.shape_cast %24 : vector<1x8x4xf32> to vector<8x4xf32>
    %cst_17 = arith.constant dense<0.000000e+00> : vector<8x222xf32>
    %26 = tpu.matmul %25, %23, %cst_17 {dimension_numbers = #tpu.dot_dimension_numbers<[1], [0], [0], [1], [0, 0, 1, 1], [], []>} : vector<8x4xf32>, vector<4x222xf32>, vector<8x222xf32> -> vector<8x222xf32>
    %27 = arith.addf %22, %26 : vector<8x222xf32>
    %28 = vector.extract_strided_slice %1 {offsets = [0, 18], sizes = [4, 222], strides = [1, 1]} : vector<4x256xf32> to vector<4x222xf32>
    %c5 = arith.constant 5 : index
    %c0_18 = arith.constant 0 : index
    %c0_19 = arith.constant 0 : index
    %29 = vector.load %arg3[%c5, %c0_18, %c0_19] : memref<9x8x4xf32, #tpu.memory_space<vmem>>, vector<1x8x4xf32>
    %30 = vector.shape_cast %29 : vector<1x8x4xf32> to vector<8x4xf32>
    %cst_20 = arith.constant dense<0.000000e+00> : vector<8x222xf32>
    %31 = tpu.matmul %30, %28, %cst_20 {dimension_numbers = #tpu.dot_dimension_numbers<[1], [0], [0], [1], [0, 0, 1, 1], [], []>} : vector<8x4xf32>, vector<4x222xf32>, vector<8x222xf32> -> vector<8x222xf32>
    %32 = arith.addf %27, %31 : vector<8x222xf32>
    %33 = vector.extract_strided_slice %1 {offsets = [0, 32], sizes = [4, 222], strides = [1, 1]} : vector<4x256xf32> to vector<4x222xf32>
    %c6 = arith.constant 6 : index
    %c0_21 = arith.constant 0 : index
    %c0_22 = arith.constant 0 : index
    %34 = vector.load %arg3[%c6, %c0_21, %c0_22] : memref<9x8x4xf32, #tpu.memory_space<vmem>>, vector<1x8x4xf32>
    %35 = vector.shape_cast %34 : vector<1x8x4xf32> to vector<8x4xf32>
    %cst_23 = arith.constant dense<0.000000e+00> : vector<8x222xf32>
    %36 = tpu.matmul %35, %33, %cst_23 {dimension_numbers = #tpu.dot_dimension_numbers<[1], [0], [0], [1], [0, 0, 1, 1], [], []>} : vector<8x4xf32>, vector<4x222xf32>, vector<8x222xf32> -> vector<8x222xf32>
    %37 = arith.addf %32, %36 : vector<8x222xf32>
    %38 = vector.extract_strided_slice %1 {offsets = [0, 33], sizes = [4, 222], strides = [1, 1]} : vector<4x256xf32> to vector<4x222xf32>
    %c7 = arith.constant 7 : index
    %c0_24 = arith.constant 0 : index
    %c0_25 = arith.constant 0 : index
    %39 = vector.load %arg3[%c7, %c0_24, %c0_25] : memref<9x8x4xf32, #tpu.memory_space<vmem>>, vector<1x8x4xf32>
    %40 = vector.shape_cast %39 : vector<1x8x4xf32> to vector<8x4xf32>
    %cst_26 = arith.constant dense<0.000000e+00> : vector<8x222xf32>
    %41 = tpu.matmul %40, %38, %cst_26 {dimension_numbers = #tpu.dot_dimension_numbers<[1], [0], [0], [1], [0, 0, 1, 1], [], []>} : vector<8x4xf32>, vector<4x222xf32>, vector<8x222xf32> -> vector<8x222xf32>
    %42 = arith.addf %37, %41 : vector<8x222xf32>
    %43 = vector.extract_strided_slice %1 {offsets = [0, 34], sizes = [4, 222], strides = [1, 1]} : vector<4x256xf32> to vector<4x222xf32>
    %c8 = arith.constant 8 : index
    %c0_27 = arith.constant 0 : index
    %c0_28 = arith.constant 0 : index
    %44 = vector.load %arg3[%c8, %c0_27, %c0_28] : memref<9x8x4xf32, #tpu.memory_space<vmem>>, vector<1x8x4xf32>
    %45 = vector.shape_cast %44 : vector<1x8x4xf32> to vector<8x4xf32>
    %cst_29 = arith.constant dense<0.000000e+00> : vector<8x222xf32>
    %46 = tpu.matmul %45, %43, %cst_29 {dimension_numbers = #tpu.dot_dimension_numbers<[1], [0], [0], [1], [0, 0, 1, 1], [], []>} : vector<8x4xf32>, vector<4x222xf32>, vector<8x222xf32> -> vector<8x222xf32>
    %47 = arith.addf %42, %46 : vector<8x222xf32>
    %c0_30 = arith.constant 0 : index
    %c0_31 = arith.constant 0 : index
    %48 = vector.load %arg4[%c0_30, %c0_31] : memref<8x1xf32, #tpu.memory_space<vmem>>, vector<8x1xf32>
    %49 = vector.broadcast %48 : vector<8x1xf32> to vector<8x222xf32>
    %50 = arith.addf %47, %49 : vector<8x222xf32>
    %c0_32 = arith.constant 0 : index
    %51 = memref.load %arg1[%c0_32] : memref<1xi32, #tpu.memory_space<smem>>
    %c2048_i32 = arith.constant 2048 : i32
    %52 = arith.muli %arg0, %c2048_i32 : i32
    %53 = tpu.iota {dimensions = array<i32: 0>} : vector<8x222xi32>
    %54 = tpu.iota {dimensions = array<i32: 1>} : vector<8x222xi32>
    %c256_i32 = arith.constant 256 : i32
    %55 = vector.broadcast %c256_i32 : i32 to vector<8x222xi32>
    %56 = arith.muli %53, %55 : vector<8x222xi32>
    %57 = vector.broadcast %52 : i32 to vector<8x222xi32>
    %58 = arith.addi %57, %56 : vector<8x222xi32>
    %59 = arith.addi %58, %54 : vector<8x222xi32>
    %c-1640531527_i32 = arith.constant -1640531527 : i32
    %60 = arith.muli %51, %c-1640531527_i32 : i32
    %61 = vector.broadcast %60 : i32 to vector<8x222xi32>
    %62 = arith.xori %59, %61 : vector<8x222xi32>
    %c16_i32 = arith.constant 16 : i32
    %63 = vector.broadcast %c16_i32 : i32 to vector<8x222xi32>
    %64 = arith.shrui %62, %63 : vector<8x222xi32>
    %65 = arith.xori %62, %64 : vector<8x222xi32>
    %c2146121005_i32 = arith.constant 2146121005 : i32
    %66 = vector.broadcast %c2146121005_i32 : i32 to vector<8x222xi32>
    %67 = arith.muli %65, %66 : vector<8x222xi32>
    %c15_i32 = arith.constant 15 : i32
    %68 = vector.broadcast %c15_i32 : i32 to vector<8x222xi32>
    %69 = arith.shrui %67, %68 : vector<8x222xi32>
    %70 = arith.xori %67, %69 : vector<8x222xi32>
    %c-2073254261_i32 = arith.constant -2073254261 : i32
    %71 = vector.broadcast %c-2073254261_i32 : i32 to vector<8x222xi32>
    %72 = arith.muli %70, %71 : vector<8x222xi32>
    %c16_i32_33 = arith.constant 16 : i32
    %73 = vector.broadcast %c16_i32_33 : i32 to vector<8x222xi32>
    %74 = arith.shrui %72, %73 : vector<8x222xi32>
    %75 = arith.xori %72, %74 : vector<8x222xi32>
    %c429496730_i32 = arith.constant 429496730 : i32
    %76 = vector.broadcast %c429496730_i32 : i32 to vector<8x222xi32>
    %77 = arith.cmpi uge, %75, %76 : vector<8x222xi32>
    %cst_34 = arith.constant 0.000000e+00 : f32
    %78 = vector.broadcast %cst_34 : f32 to vector<8x222xf32>
    %79 = arith.select %77, %50, %78 : vector<8x222xi1>, vector<8x222xf32>
    %c0_35 = arith.constant 0 : index
    %c0_36 = arith.constant 0 : index
    %c0_37 = arith.constant 0 : index
    %80 = vector.load %arg5[%c0_35, %c0_36, %c0_37] : memref<1x8x256xf32, #tpu.memory_space<vmem>>, vector<1x8x222xf32>
    %81 = vector.shape_cast %80 : vector<1x8x222xf32> to vector<8x222xf32>
    %82 = vector.shape_cast %79 : vector<8x222xf32> to vector<1x8x222xf32>
    tpu.vector_store %arg5[%c0_35, %c0_36, %c0_37], %82 {strides = array<i32>} : memref<1x8x256xf32, #tpu.memory_space<vmem>>, vector<1x8x222xf32>,
    %cst_38 = arith.constant 0.000000e+00 : f32
    %83 = vector.broadcast %cst_38 : f32 to vector<8x34xf32>
    %c0_39 = arith.constant 0 : index
    %c0_40 = arith.constant 0 : index
    %c222 = arith.constant 222 : index
    %84 = vector.load %arg5[%c0_39, %c0_40, %c222] : memref<1x8x256xf32, #tpu.memory_space<vmem>>, vector<1x8x34xf32>
    %85 = vector.shape_cast %84 : vector<1x8x34xf32> to vector<8x34xf32>
    %86 = vector.shape_cast %83 : vector<8x34xf32> to vector<1x8x34xf32>
    tpu.vector_store %arg5[%c0_39, %c0_40, %c222], %86 {strides = array<i32>} : memref<1x8x256xf32, #tpu.memory_space<vmem>>, vector<1x8x34xf32>,
    return
  }
  func.func @transform_0(%arg0: i32, %arg1: memref<1xi32, #tpu.memory_space<smem>>) -> (i32, i32, i32) {
    %c0_i32 = arith.constant 0 : i32
    %c0_i32_0 = arith.constant 0 : i32
    %c0_i32_1 = arith.constant 0 : i32
    return %arg0, %c0_i32, %c0_i32_0 : i32, i32, i32
  }
  func.func @transform_1(%arg0: i32, %arg1: memref<1xi32, #tpu.memory_space<smem>>) -> (i32, i32, i32) {
    %c0_i32 = arith.constant 0 : i32
    %c0_i32_0 = arith.constant 0 : i32
    %c0_i32_1 = arith.constant 0 : i32
    %c0_i32_2 = arith.constant 0 : i32
    return %c0_i32, %c0_i32_0, %c0_i32_1 : i32, i32, i32
  }
  func.func @transform_2(%arg0: i32, %arg1: memref<1xi32, #tpu.memory_space<smem>>) -> (i32, i32) {
    %c0_i32 = arith.constant 0 : i32
    %c0_i32_0 = arith.constant 0 : i32
    %c0_i32_1 = arith.constant 0 : i32
    return %c0_i32, %c0_i32_0 : i32, i32
  }
  func.func @transform_3(%arg0: i32, %arg1: memref<1xi32, #tpu.memory_space<smem>>) -> (i32, i32, i32) {
    %c0_i32 = arith.constant 0 : i32
    %c0_i32_0 = arith.constant 0 : i32
    %c0_i32_1 = arith.constant 0 : i32
    return %arg0, %c0_i32, %c0_i32_0 : i32, i32, i32
  }
}

</mosaic_0001>

<llo_original>
// kernel: tpu_custom_call.1
$region0: #{tpu_custom_call.1}
  #allocation0 [shape = 'u32[]', space=smem, size = 0x4, offset = 0x4, fixed_abs, tag = 'smem constant byte address 0x4 - core index']
  #allocation1 [shape = 'u32[72,128]{1,0:T(1,128)}', space=vmem, size = 0x9000, scoped, tag = 'internal scratch']
  #allocation2 [shape = 's32[1]{0}', space=sflag, size = 0x4, scoped, tag = 'scoped memory for tpu_custom_call.1']
  #allocation3 [shape = 's32[1]{0:T(128)S(6)}', space=smem, size = 0x200, scoped, tag = 'prefetched SMEM operand 0']
  %s0 = inlined_call_operand.<no memory space> [shape: s32[1], index: 0, kind: input, shape index: {}]
  %s1 = inlined_call_operand.vmem [shape: f32[2,4,256], index: 1, kind: input, shape index: {}]
  %s2 = inlined_call_operand.vmem [shape: f32[9,8,4], index: 2, kind: input, shape index: {}]
  %s3 = inlined_call_operand.vmem [shape: f32[8,1], index: 3, kind: input, shape index: {}]
  %s4 = inlined_call_operand.hbm [shape: f32[2,8,256], index: 4, kind: output, shape index: {}]
  %s5 = sld [smem:[#allocation0]]
  $region45: #{tpu_custom_call.1} parent=0
    _
  %s7 = ssub.s32 1, %s5
  %s8 = scalar_select 0, %s7, %s5
  %9 = sst [smem:[#allocation3]] %s0
  $region1: #{tpu_custom_call.1} parent=0
    #allocation4 [shape = 'u8[16384]{0}', space=vmem, size = 0x4000, scoped, tag = 'output window, operand 0']
    #allocation5 [shape = 's32[2]{0}', space=sflag, size = 0x8, scoped, tag = 'scoped memory for tpu_custom_call.1']
    %10 = vsyncpa [#allocation5], 0
    %s11 = scalar_lea.sflag [#allocation5], 1
    %12 = vsyncpa %s11, 0
    loop: start=0, step=1, limit=4
    $region2: #{tpu_custom_call.1} parent=1 // loop_pre_header
      _
    $region3: #{tpu_custom_call.1} parent=1 // loop_header
      %s14 = sphi 0, %s18
      %p15 = scmp.ge.s32.totalorder %s14, 4
      %s24 = sphi 0, %s26
      %s27 = sphi 0, %s24
      %s28 = sphi 0, %s27
      %s44 = sphi 0, %s28
      %s48 = sphi 0, %s48
      %s50 = sphi 0, %s48
      %s51 = sphi 0, %s50
      %s65 = sphi 0, %s51
      %s69 = sphi 0, %s69
      %s71 = sphi 0, %s69
      %s72 = sphi 0, %s71
      %s86 = sphi 0, %s72
      %s92 = sphi 0, %s94
      %s95 = sphi 0, %s92
      %s96 = sphi 0, %s95
      %s112 = sphi 0, %s96
    $region4: #{tpu_custom_call.1} parent=1 // loop_header_branch
      %17 = sbr.rel (%p15) target = $region8
    $region5: #{tpu_custom_call.1} parent=1 // loop_body
      %s19 = ssub.s32 %s14, 1
      %s20 = ssub.s32 %s14, 2
      %s21 = sadd.s32 %s14, 1
      %s22 = ssub.s32 %s14, %s21
      %p23 = scmp.eq.s32.totalorder %s22, 0
      %s25 = sadd.s32 %s24, 1
      %s26 = scalar_select %p23, %s24, %s25
      %p29 = pneg %p23
      %p30 = scmp.eq.s32.totalorder %s14, 1
      %p31 = por %p29, %p30
      %p32 = scmp.ne.s32.totalorder %s24, %s27
      %p33 = scmp.eq.s32.totalorder %s14, 0
      %p34 = por %p32, %p33
      %p35 = scmp.ne.s32.totalorder %s24, %s27
      %p36 = scmp.eq.s32.totalorder %s19, 1
      %p37 = por %p35, %p36
      %p38 = scmp.ne.s32.totalorder %s27, %s28
      %p39 = scmp.eq.s32.totalorder %s19, 0
      %p40 = por %p38, %p39
      %p41 = scmp.ne.s32.totalorder %s27, %s28
      %p42 = scmp.eq.s32.totalorder %s20, 1
      %p43 = por %p41, %p42
      %p45 = scmp.ne.s32.totalorder %s28, %s44
      %p46 = scmp.eq.s32.totalorder %s20, 0
      %p47 = por %p45, %p46
      %s49 = sadd.s32 %s48, 1
      %p52 = scmp.eq.s32.totalorder %s14, 1
      %p53 = scmp.ne.s32.totalorder %s48, %s50
      %p54 = scmp.eq.s32.totalorder %s14, 0
      %p55 = por %p53, %p54
      %p56 = scmp.ne.s32.totalorder %s48, %s50
      %p57 = scmp.eq.s32.totalorder %s19, 1
      %p58 = por %p56, %p57
      %p59 = scmp.ne.s32.totalorder %s50, %s51
      %p60 = scmp.eq.s32.totalorder %s19, 0
      %p61 = por %p59, %p60
      %p62 = scmp.ne.s32.totalorder %s50, %s51
      %p63 = scmp.eq.s32.totalorder %s20, 1
      %p64 = por %p62, %p63
      %p66 = scmp.ne.s32.totalorder %s51, %s65
      %p67 = scmp.eq.s32.totalorder %s20, 0
      %p68 = por %p66, %p67
      %s70 = sadd.s32 %s69, 1
      %p73 = scmp.eq.s32.totalorder %s14, 1
      %p74 = scmp.ne.s32.totalorder %s69, %s71
      %p75 = scmp.eq.s32.totalorder %s14, 0
      %p76 = por %p74, %p75
      %p77 = scmp.ne.s32.totalorder %s69, %s71
      %p78 = scmp.eq.s32.totalorder %s19, 1
      %p79 = por %p77, %p78
      %p80 = scmp.ne.s32.totalorder %s71, %s72
      %p81 = scmp.eq.s32.totalorder %s19, 0
      %p82 = por %p80, %p81
      %p83 = scmp.ne.s32.totalorder %s71, %s72
      %p84 = scmp.eq.s32.totalorder %s20, 1
      %p85 = por %p83, %p84
      %p87 = scmp.ne.s32.totalorder %s72, %s86
      %p88 = scmp.eq.s32.totalorder %s20, 0
      %p89 = por %p87, %p88
      %s90 = ssub.s32 %s14, %s21
      %p91 = scmp.eq.s32.totalorder %s90, 0
      %s93 = sadd.s32 %s92, 1
      %s94 = scalar_select %p91, %s92, %s93
      %p97 = pneg %p91
      %p98 = scmp.eq.s32.totalorder %s14, 1
      %p99 = por %p97, %p98
      %p100 = scmp.ne.s32.totalorder %s92, %s95
      %p101 = scmp.eq.s32.totalorder %s14, 0
      %p102 = por %p100, %p101
      %p103 = scmp.ne.s32.totalorder %s92, %s95
      %p104 = scmp.eq.s32.totalorder %s19, 1
      %p105 = por %p103, %p104
      %p106 = scmp.ne.s32.totalorder %s95, %s96
      %p107 = scmp.eq.s32.totalorder %s19, 0
      %p108 = por %p106, %p107
      %p109 = scmp.ne.s32.totalorder %s95, %s96
      %p110 = scmp.eq.s32.totalorder %s20, 1
      %p111 = por %p109, %p110
      %p113 = scmp.ne.s32.totalorder %s96, %s112
      %p114 = scmp.eq.s32.totalorder %s20, 0
      %p115 = por %p113, %p114
      %p116 = scmp.le.s32.totalorder 1, %s14
      %p117 = scmp.lt.s32.totalorder %s14, 3
      %p118 = pnand %p116, %p117
      %p119 = pneg %p118
      // Predicated region
      $region9: #{tpu_custom_call.1} parent=5 // pred_check
        _
      $region10: #{tpu_custom_call.1} parent=5 // pred_check_branch
        %121 = sbr.rel (%p118) target = $region12
      $region11: #{tpu_custom_call.1} parent=5 // pred_region
        %s122 = ssub.s32 %s14, 1
        // Predicated region
        $region13: #{tpu_custom_call.1} parent=11 // pred_check
          %p123 = pneg %p61
        $region14: #{tpu_custom_call.1} parent=11 // pred_check_branch
          %125 = sbr.rel (%p123) target = $region16
        $region15: #{tpu_custom_call.1} parent=11 // pred_region
          _
        $region16: #{tpu_custom_call.1} parent=11 // pred_fallthru
          _
        // Predicated region
        $region17: #{tpu_custom_call.1} parent=11 // pred_check
          %p126 = pneg %p82
        $region18: #{tpu_custom_call.1} parent=11 // pred_check_branch
          %128 = sbr.rel (%p126) target = $region20
        $region19: #{tpu_custom_call.1} parent=11 // pred_region
          _
        $region20: #{tpu_custom_call.1} parent=11 // pred_fallthru
          _
      $region12: #{tpu_custom_call.1} parent=5 // pred_fallthru
        _
      %p129 = scmp.lt.s32.totalorder %s14, 2
      // Predicated region
      $region21: #{tpu_custom_call.1} parent=5 // pred_check
        %p130 = pneg %p129
      $region22: #{tpu_custom_call.1} parent=5 // pred_check_branch
        %132 = sbr.rel (%p130) target = $region24
      $region23: #{tpu_custom_call.1} parent=5 // pred_region
        // Predicated region
        $region25: #{tpu_custom_call.1} parent=23 // pred_check
          %p133 = pneg %p34
        $region26: #{tpu_custom_call.1} parent=23 // pred_check_branch
          %135 = sbr.rel (%p133) target = $region28
        $region27: #{tpu_custom_call.1} parent=23 // pred_region
          %p136 = scmp.lt.s32.totalorder %s14, 1
          %s137 = scalar_select %p136, %s14, 1
          %s138 = smul.addr %s137, 2
          %s139 = smul.addr %s138, 4
          %s140 = scalar_lea.vmem %s1, %s139
        $region28: #{tpu_custom_call.1} parent=23 // pred_fallthru
          _
      $region24: #{tpu_custom_call.1} parent=5 // pred_fallthru
        _
      %p141 = scmp.le.s32.totalorder 1, %s14
      %p142 = scmp.lt.s32.totalorder %s14, 3
      %p143 = pnand %p141, %p142
      %p144 = pneg %p143
      // Predicated region
      $region29: #{tpu_custom_call.1} parent=5 // pred_check
        _
      $region30: #{tpu_custom_call.1} parent=5 // pred_check_branch
        %146 = sbr.rel (%p143) target = $region32
      $region31: #{tpu_custom_call.1} parent=5 // pred_region
        %s147 = ssub.s32 %s14, 1
        %p148 = scmp.lt.s32.totalorder %s19, 1
        %s149 = scalar_select %p148, %s19, 1
        %s150 = smul.addr %s149, 2
        %s151 = smul.addr %s150, 4
        %s152 = scalar_lea.vmem %s1, %s151
        %p153 = pneg %p40
        %p154 = pneg %p37
        %p155 = pneg %p61
        %p156 = pneg %p58
        %p157 = pneg %p82
        %p158 = pneg %p79
        %p159 = pneg %p108
        %p160 = pneg %p105
        %s161 = sand.u32 %s95, 1
        %s162 = scalar_lea.sflag [#allocation5], %s161
        %s163 = sand.u32 %s95, 1
        %s164 = smul.addr %s163, 16
        %s165 = scalar_lea.vmem [#allocation4], %s164
        %p166 = scmp.lt.s32.totalorder %s19, 1
        %s167 = scalar_select %p166, %s19, 1
        %s168 = smul.addr %s167, 2
        %s169 = smul.addr %s168, 4
        %s170 = scalar_lea.vmem %s1, %s169
        %v171 = vld [vmem:[%s170] sm:$0xff]
        %v172 = vld [vmem:[%s2] sm:$0xff]
        %s173 = scalar_lea.vmem %s2, 8
        %v174 = vld [vmem:[%s173] sm:$0xff]
        %176 = vst [vmem:[#allocation1] ss:$2 sm:$0xff] %v171
        %v177 = vld.sshfl [vmem:[#allocation1] sm:$0xff pattern:$0x75316420]
        %v178 = vld.sshfl [vmem:[#allocation1 + $0x8] sm:$0xff pattern:$0x75316420]
        %179 = vrot.lane.b32.xlu0 %v177, 127
        %v180 = vpop.permute.xlu0 %179
        %181 = vrot.lane.b32.xlu0 %v178, 127
        %v182 = vpop.permute.xlu0 %181
        %vm183 = vcmask 1039360
        %v184 = vsel %vm183, %v180, %v182
        %vm185 = vcmask 31744
        %v187 = vsel %vm185, %v174, 0
        %vm189 = vcmask 1043456
        %v190 = vsel %vm189, %v184, 0
        %v192 = vsel %vm189, %v182, 0
        %194 = vmatpush.msra.mxu0 0.0
        %195 = vmatpush.msra.mxu0 0.0
        %196 = vmatpush.msra.mxu0 0.0
        %197 = vmatpush.msra.mxu0 0.0
        %198 = vmatpush.msra.mxu0 0.0
        %199 = vmatpush.msra.mxu0 0.0
        %200 = vmatpush.msra.mxu0 0.0
        %201 = vmatpush.msra.mxu0 0.0
        %202 = vmatpush.msra.mxu0 0.0
        %203 = vmatpush.msra.mxu0 0.0
        %204 = vmatpush.msra.mxu0 0.0
        %205 = vmatpush.msra.mxu0 0.0
        %206 = vmatpush.msra.mxu0 0.0
        %207 = vmatpush.msra.mxu0 0.0
        %208 = vmatpush.msra.mxu0 0.0
        %209 = vmatpush.msra.mxu0 %v190
        %210 = vmatmul.f32.gmra.mxu0 %v187
        %v211 = vpop.f32.mrf.mxu0
        %v212 = vadd.f32 0.0, %v211
        %213 = vdwg.mxu0
        %214 = vmatpush.msra.mxu0 0.0
        %215 = vmatpush.msra.mxu0 0.0
        %216 = vmatpush.msra.mxu0 0.0
        %217 = vmatpush.msra.mxu0 0.0
        %218 = vmatpush.msra.mxu0 0.0
        %219 = vmatpush.msra.mxu0 0.0
        %220 = vmatpush.msra.mxu0 0.0
        %221 = vmatpush.msra.mxu0 0.0
        %222 = vmatpush.msra.mxu0 0.0
        %223 = vmatpush.msra.mxu0 0.0
        %224 = vmatpush.msra.mxu0 0.0
        %225 = vmatpush.msra.mxu0 0.0
        %226 = vmatpush.msra.mxu0 0.0
        %227 = vmatpush.msra.mxu0 0.0
        %228 = vmatpush.msra.mxu0 0.0
        %229 = vmatpush.msra.mxu0 %v192
        %230 = vmatmul.f32.gmra.mxu0 %v187
        %v231 = vpop.f32.mrf.mxu0
        %v232 = vadd.f32 0.0, %v231
        %233 = vdwg.mxu0
        %234 = vst [vmem:[#allocation1] ss:$2 sm:$0xff] %v171
        %v235 = vld.sshfl [vmem:[#allocation1] sm:$0xff pattern:$0x75316420]
        %v236 = vld.sshfl [vmem:[#allocation1 + $0x8] sm:$0xff pattern:$0x75316420]
        %v238 = vsel %vm185, %v172, 0
        %v240 = vsel %vm189, %v235, 0
        %v242 = vsel %vm189, %v236, 0
        %244 = vmatpush.msra.mxu0 0.0
        %245 = vmatpush.msra.mxu0 0.0
        %246 = vmatpush.msra.mxu0 0.0
        %247 = vmatpush.msra.mxu0 0.0
        %248 = vmatpush.msra.mxu0 0.0
        %249 = vmatpush.msra.mxu0 0.0
        %250 = vmatpush.msra.mxu0 0.0
        %251 = vmatpush.msra.mxu0 0.0
        %252 = vmatpush.msra.mxu0 0.0
        %253 = vmatpush.msra.mxu0 0.0
        %254 = vmatpush.msra.mxu0 0.0
        %255 = vmatpush.msra.mxu0 0.0
        %256 = vmatpush.msra.mxu0 0.0
        %257 = vmatpush.msra.mxu0 0.0
        %258 = vmatpush.msra.mxu0 0.0
        %259 = vmatpush.msra.mxu0 %v240
        %260 = vmatmul.f32.gmra.mxu0 %v238
        %v261 = vpop.f32.mrf.mxu0
        %v262 = vadd.f32 %v212, %v261
        %263 = vdwg.mxu0
        %264 = vmatpush.msra.mxu0 0.0
        %265 = vmatpush.msra.mxu0 0.0
        %266 = vmatpush.msra.mxu0 0.0
        %267 = vmatpush.msra.mxu0 0.0
        %268 = vmatpush.msra.mxu0 0.0
        %269 = vmatpush.msra.mxu0 0.0
        %270 = vmatpush.msra.mxu0 0.0
        %271 = vmatpush.msra.mxu0 0.0
        %272 = vmatpush.msra.mxu0 0.0
        %273 = vmatpush.msra.mxu0 0.0
        %274 = vmatpush.msra.mxu0 0.0
        %275 = vmatpush.msra.mxu0 0.0
        %276 = vmatpush.msra.mxu0 0.0
        %277 = vmatpush.msra.mxu0 0.0
        %278 = vmatpush.msra.mxu0 0.0
        %279 = vmatpush.msra.mxu0 %v242
        %280 = vmatmul.f32.gmra.mxu0 %v238
        %v281 = vpop.f32.mrf.mxu0
        %v282 = vadd.f32 %v232, %v281
        %283 = vdwg.mxu0
        %s284 = scalar_lea.vmem %s2, 16
        %v285 = vld [vmem:[%s284] sm:$0xff]
        %286 = vst [vmem:[#allocation1] ss:$2 sm:$0xff] %v171
        %v287 = vld.sshfl [vmem:[#allocation1] sm:$0xff pattern:$0x75316420]
        %v288 = vld.sshfl [vmem:[#allocation1 + $0x8] sm:$0xff pattern:$0x75316420]
        %289 = vrot.lane.b32.xlu0 %v287, 126
        %v290 = vpop.permute.xlu0 %289
        %291 = vrot.lane.b32.xlu0 %v288, 126
        %v292 = vpop.permute.xlu0 %291
        %vm293 = vcmask 1031168
        %v294 = vsel %vm293, %v290, %v292
        %v296 = vsel %vm185, %v285, 0
        %v298 = vsel %vm189, %v294, 0
        %v300 = vsel %vm189, %v292, 0
        %302 = vmatpush.msra.mxu0 0.0
        %303 = vmatpush.msra.mxu0 0.0
        %304 = vmatpush.msra.mxu0 0.0
        %305 = vmatpush.msra.mxu0 0.0
        %306 = vmatpush.msra.mxu0 0.0
        %307 = vmatpush.msra.mxu0 0.0
        %308 = vmatpush.msra.mxu0 0.0
        %309 = vmatpush.msra.mxu0 0.0
        %310 = vmatpush.msra.mxu0 0.0
        %311 = vmatpush.msra.mxu0 0.0
        %312 = vmatpush.msra.mxu0 0.0
        %313 = vmatpush.msra.mxu0 0.0
        %314 = vmatpush.msra.mxu0 0.0
        %315 = vmatpush.msra.mxu0 0.0
        %316 = vmatpush.msra.mxu0 0.0
        %317 = vmatpush.msra.mxu0 %v298
        %318 = vmatmul.f32.gmra.mxu0 %v296
        %v319 = vpop.f32.mrf.mxu0
        %v320 = vadd.f32 0.0, %v319
        %321 = vdwg.mxu0
        %322 = vmatpush.msra.mxu0 0.0
        %323 = vmatpush.msra.mxu0 0.0
        %324 = vmatpush.msra.mxu0 0.0
        %325 = vmatpush.msra.mxu0 0.0
        %326 = vmatpush.msra.mxu0 0.0
        %327 = vmatpush.msra.mxu0 0.0
        %328 = vmatpush.msra.mxu0 0.0
        %329 = vmatpush.msra.mxu0 0.0
        %330 = vmatpush.msra.mxu0 0.0
        %331 = vmatpush.msra.mxu0 0.0
        %332 = vmatpush.msra.mxu0 0.0
        %333 = vmatpush.msra.mxu0 0.0
        %334 = vmatpush.msra.mxu0 0.0
        %335 = vmatpush.msra.mxu0 0.0
        %336 = vmatpush.msra.mxu0 0.0
        %337 = vmatpush.msra.mxu0 %v300
        %338 = vmatmul.f32.gmra.mxu0 %v296
        %v339 = vpop.f32.mrf.mxu0
        %v340 = vadd.f32 0.0, %v339
        %341 = vdwg.mxu0
        %v342 = vadd.f32 %v262, %v320
        %v343 = vadd.f32 %v282, %v340
        %s344 = scalar_lea.vmem %s2, 24
        %v345 = vld [vmem:[%s344] sm:$0xff]
        %346 = vst [vmem:[#allocation1] ss:$2 sm:$0xff] %v171
        %v347 = vld.sshfl [vmem:[#allocation1] sm:$0xff pattern:$0x75316420]
        %v348 = vld.sshfl [vmem:[#allocation1 + $0x8] sm:$0xff pattern:$0x75316420]
        %349 = vrot.lane.b32.xlu0 %v347, 112
        %v350 = vpop.permute.xlu0 %349
        %351 = vrot.lane.b32.xlu0 %v348, 112
        %v352 = vpop.permute.xlu0 %351
        %vm353 = vcmask 916480
        %v354 = vsel %vm353, %v350, %v352
        %v356 = vsel %vm185, %v345, 0
        %v358 = vsel %vm189, %v354, 0
        %v360 = vsel %vm189, %v352, 0
        %362 = vmatpush.msra.mxu0 0.0
        %363 = vmatpush.msra.mxu0 0.0
        %364 = vmatpush.msra.mxu0 0.0
        %365 = vmatpush.msra.mxu0 0.0
        %366 = vmatpush.msra.mxu0 0.0
        %367 = vmatpush.msra.mxu0 0.0
        %368 = vmatpush.msra.mxu0 0.0
        %369 = vmatpush.msra.mxu0 0.0
        %370 = vmatpush.msra.mxu0 0.0
        %371 = vmatpush.msra.mxu0 0.0
        %372 = vmatpush.msra.mxu0 0.0
        %373 = vmatpush.msra.mxu0 0.0
        %374 = vmatpush.msra.mxu0 0.0
        %375 = vmatpush.msra.mxu0 0.0
        %376 = vmatpush.msra.mxu0 0.0
        %377 = vmatpush.msra.mxu0 %v358
        %378 = vmatmul.f32.gmra.mxu0 %v356
        %v379 = vpop.f32.mrf.mxu0
        %v380 = vadd.f32 0.0, %v379
        %381 = vdwg.mxu0
        %382 = vmatpush.msra.mxu0 0.0
        %383 = vmatpush.msra.mxu0 0.0
        %384 = vmatpush.msra.mxu0 0.0
        %385 = vmatpush.msra.mxu0 0.0
        %386 = vmatpush.msra.mxu0 0.0
        %387 = vmatpush.msra.mxu0 0.0
        %388 = vmatpush.msra.mxu0 0.0
        %389 = vmatpush.msra.mxu0 0.0
        %390 = vmatpush.msra.mxu0 0.0
        %391 = vmatpush.msra.mxu0 0.0
        %392 = vmatpush.msra.mxu0 0.0
        %393 = vmatpush.msra.mxu0 0.0
        %394 = vmatpush.msra.mxu0 0.0
        %395 = vmatpush.msra.mxu0 0.0
        %396 = vmatpush.msra.mxu0 0.0
        %397 = vmatpush.msra.mxu0 %v360
        %398 = vmatmul.f32.gmra.mxu0 %v356
        %v399 = vpop.f32.mrf.mxu0
        %v400 = vadd.f32 0.0, %v399
        %401 = vdwg.mxu0
        %v402 = vadd.f32 %v342, %v380
        %v403 = vadd.f32 %v343, %v400
        %s404 = scalar_lea.vmem %s2, 32
        %v405 = vld [vmem:[%s404] sm:$0xff]
        %406 = vst [vmem:[#allocation1] ss:$2 sm:$0xff] %v171
        %v407 = vld.sshfl [vmem:[#allocation1] sm:$0xff pattern:$0x75316420]
        %v408 = vld.sshfl [vmem:[#allocation1 + $0x8] sm:$0xff pattern:$0x75316420]
        %409 = vrot.lane.b32.xlu0 %v407, 111
        %v410 = vpop.permute.xlu0 %409
        %411 = vrot.lane.b32.xlu0 %v408, 111
        %v412 = vpop.permute.xlu0 %411
        %vm413 = vcmask 908288
        %v414 = vsel %vm413, %v410, %v412
        %v416 = vsel %vm185, %v405, 0
        %v418 = vsel %vm189, %v414, 0
        %v420 = vsel %vm189, %v412, 0
        %422 = vmatpush.msra.mxu0 0.0
        %423 = vmatpush.msra.mxu0 0.0
        %424 = vmatpush.msra.mxu0 0.0
        %425 = vmatpush.msra.mxu0 0.0
        %426 = vmatpush.msra.mxu0 0.0
        %427 = vmatpush.msra.mxu0 0.0
        %428 = vmatpush.msra.mxu0 0.0
        %429 = vmatpush.msra.mxu0 0.0
        %430 = vmatpush.msra.mxu0 0.0
        %431 = vmatpush.msra.mxu0 0.0
        %432 = vmatpush.msra.mxu0 0.0
        %433 = vmatpush.msra.mxu0 0.0
        %434 = vmatpush.msra.mxu0 0.0
        %435 = vmatpush.msra.mxu0 0.0
        %436 = vmatpush.msra.mxu0 0.0
        %437 = vmatpush.msra.mxu0 %v418
        %438 = vmatmul.f32.gmra.mxu0 %v416
        %v439 = vpop.f32.mrf.mxu0
        %v440 = vadd.f32 0.0, %v439
        %441 = vdwg.mxu0
        %442 = vmatpush.msra.mxu0 0.0
        %443 = vmatpush.msra.mxu0 0.0
        %444 = vmatpush.msra.mxu0 0.0
        %445 = vmatpush.msra.mxu0 0.0
        %446 = vmatpush.msra.mxu0 0.0
        %447 = vmatpush.msra.mxu0 0.0
        %448 = vmatpush.msra.mxu0 0.0
        %449 = vmatpush.msra.mxu0 0.0
        %450 = vmatpush.msra.mxu0 0.0
        %451 = vmatpush.msra.mxu0 0.0
        %452 = vmatpush.msra.mxu0 0.0
        %453 = vmatpush.msra.mxu0 0.0
        %454 = vmatpush.msra.mxu0 0.0
        %455 = vmatpush.msra.mxu0 0.0
        %456 = vmatpush.msra.mxu0 0.0
        %457 = vmatpush.msra.mxu0 %v420
        %458 = vmatmul.f32.gmra.mxu0 %v416
        %v459 = vpop.f32.mrf.mxu0
        %v460 = vadd.f32 0.0, %v459
        %461 = vdwg.mxu0
        %v462 = vadd.f32 %v402, %v440
        %v463 = vadd.f32 %v403, %v460
        %s464 = scalar_lea.vmem %s2, 40
        %v465 = vld [vmem:[%s464] sm:$0xff]
        %466 = vst [vmem:[#allocation1] ss:$2 sm:$0xff] %v171
        %v467 = vld.sshfl [vmem:[#allocation1] sm:$0xff pattern:$0x75316420]
        %v468 = vld.sshfl [vmem:[#allocation1 + $0x8] sm:$0xff pattern:$0x75316420]
        %469 = vrot.lane.b32.xlu0 %v467, 110
        %v470 = vpop.permute.xlu0 %469
        %471 = vrot.lane.b32.xlu0 %v468, 110
        %v472 = vpop.permute.xlu0 %471
        %vm473 = vcmask 900096
        %v474 = vsel %vm473, %v470, %v472
        %v476 = vsel %vm185, %v465, 0
        %v478 = vsel %vm189, %v474, 0
        %v480 = vsel %vm189, %v472, 0
        %482 = vmatpush.msra.mxu0 0.0
        %483 = vmatpush.msra.mxu0 0.0
        %484 = vmatpush.msra.mxu0 0.0
        %485 = vmatpush.msra.mxu0 0.0
        %486 = vmatpush.msra.mxu0 0.0
        %487 = vmatpush.msra.mxu0 0.0
        %488 = vmatpush.msra.mxu0 0.0
        %489 = vmatpush.msra.mxu0 0.0
        %490 = vmatpush.msra.mxu0 0.0
        %491 = vmatpush.msra.mxu0 0.0
        %492 = vmatpush.msra.mxu0 0.0
        %493 = vmatpush.msra.mxu0 0.0
        %494 = vmatpush.msra.mxu0 0.0
        %495 = vmatpush.msra.mxu0 0.0
        %496 = vmatpush.msra.mxu0 0.0
        %497 = vmatpush.msra.mxu0 %v478
        %498 = vmatmul.f32.gmra.mxu0 %v476
        %v499 = vpop.f32.mrf.mxu0
        %v500 = vadd.f32 0.0, %v499
        %501 = vdwg.mxu0
        %502 = vmatpush.msra.mxu0 0.0
        %503 = vmatpush.msra.mxu0 0.0
        %504 = vmatpush.msra.mxu0 0.0
        %505 = vmatpush.msra.mxu0 0.0
        %506 = vmatpush.msra.mxu0 0.0
        %507 = vmatpush.msra.mxu0 0.0
        %508 = vmatpush.msra.mxu0 0.0
        %509 = vmatpush.msra.mxu0 0.0
        %510 = vmatpush.msra.mxu0 0.0
        %511 = vmatpush.msra.mxu0 0.0
        %512 = vmatpush.msra.mxu0 0.0
        %513 = vmatpush.msra.mxu0 0.0
        %514 = vmatpush.msra.mxu0 0.0
        %515 = vmatpush.msra.mxu0 0.0
        %516 = vmatpush.msra.mxu0 0.0
        %517 = vmatpush.msra.mxu0 %v480
        %518 = vmatmul.f32.gmra.mxu0 %v476
        %v519 = vpop.f32.mrf.mxu0
        %v520 = vadd.f32 0.0, %v519
        %521 = vdwg.mxu0
        %v522 = vadd.f32 %v462, %v500
        %v523 = vadd.f32 %v463, %v520
        %s524 = scalar_lea.vmem %s2, 48
        %v525 = vld [vmem:[%s524] sm:$0xff]
        %526 = vst [vmem:[#allocation1] ss:$2 sm:$0xff] %v171
        %v527 = vld.sshfl [vmem:[#allocation1] sm:$0xff pattern:$0x75316420]
        %v528 = vld.sshfl [vmem:[#allocation1 + $0x8] sm:$0xff pattern:$0x75316420]
        %529 = vrot.lane.b32.xlu0 %v527, 96
        %v530 = vpop.permute.xlu0 %529
        %531 = vrot.lane.b32.xlu0 %v528, 96
        %v532 = vpop.permute.xlu0 %531
        %vm533 = vcmask 785408
        %v534 = vsel %vm533, %v530, %v532
        %v536 = vsel %vm185, %v525, 0
        %v538 = vsel %vm189, %v534, 0
        %v540 = vsel %vm189, %v532, 0
        %542 = vmatpush.msra.mxu0 0.0
        %543 = vmatpush.msra.mxu0 0.0
        %544 = vmatpush.msra.mxu0 0.0
        %545 = vmatpush.msra.mxu0 0.0
        %546 = vmatpush.msra.mxu0 0.0
        %547 = vmatpush.msra.mxu0 0.0
        %548 = vmatpush.msra.mxu0 0.0
        %549 = vmatpush.msra.mxu0 0.0
        %550 = vmatpush.msra.mxu0 0.0
        %551 = vmatpush.msra.mxu0 0.0
        %552 = vmatpush.msra.mxu0 0.0
        %553 = vmatpush.msra.mxu0 0.0
        %554 = vmatpush.msra.mxu0 0.0
        %555 = vmatpush.msra.mxu0 0.0
        %556 = vmatpush.msra.mxu0 0.0
        %557 = vmatpush.msra.mxu0 %v538
        %558 = vmatmul.f32.gmra.mxu0 %v536
        %v559 = vpop.f32.mrf.mxu0
        %v560 = vadd.f32 0.0, %v559
        %561 = vdwg.mxu0
        %562 = vmatpush.msra.mxu0 0.0
        %563 = vmatpush.msra.mxu0 0.0
        %564 = vmatpush.msra.mxu0 0.0
        %565 = vmatpush.msra.mxu0 0.0
        %566 = vmatpush.msra.mxu0 0.0
        %567 = vmatpush.msra.mxu0 0.0
        %568 = vmatpush.msra.mxu0 0.0
        %569 = vmatpush.msra.mxu0 0.0
        %570 = vmatpush.msra.mxu0 0.0
        %571 = vmatpush.msra.mxu0 0.0
        %572 = vmatpush.msra.mxu0 0.0
        %573 = vmatpush.msra.mxu0 0.0
        %574 = vmatpush.msra.mxu0 0.0
        %575 = vmatpush.msra.mxu0 0.0
        %576 = vmatpush.msra.mxu0 0.0
        %577 = vmatpush.msra.mxu0 %v540
        %578 = vmatmul.f32.gmra.mxu0 %v536
        %v579 = vpop.f32.mrf.mxu0
        %v580 = vadd.f32 0.0, %v579
        %581 = vdwg.mxu0
        %v582 = vadd.f32 %v522, %v560
        %v583 = vadd.f32 %v523, %v580
        %s584 = scalar_lea.vmem %s2, 56
        %v585 = vld [vmem:[%s584] sm:$0xff]
        %586 = vst [vmem:[#allocation1] ss:$2 sm:$0xff] %v171
        %v587 = vld.sshfl [vmem:[#allocation1] sm:$0xff pattern:$0x75316420]
        %v588 = vld.sshfl [vmem:[#allocation1 + $0x8] sm:$0xff pattern:$0x75316420]
        %589 = vrot.lane.b32.xlu0 %v587, 95
        %v590 = vpop.permute.xlu0 %589
        %591 = vrot.lane.b32.xlu0 %v588, 95
        %v592 = vpop.permute.xlu0 %591
        %vm593 = vcmask 777216
        %v594 = vsel %vm593, %v590, %v592
        %v596 = vsel %vm185, %v585, 0
        %v598 = vsel %vm189, %v594, 0
        %v600 = vsel %vm189, %v592, 0
        %602 = vmatpush.msra.mxu0 0.0
        %603 = vmatpush.msra.mxu0 0.0
        %604 = vmatpush.msra.mxu0 0.0
        %605 = vmatpush.msra.mxu0 0.0
        %606 = vmatpush.msra.mxu0 0.0
        %607 = vmatpush.msra.mxu0 0.0
        %608 = vmatpush.msra.mxu0 0.0
        %609 = vmatpush.msra.mxu0 0.0
        %610 = vmatpush.msra.mxu0 0.0
        %611 = vmatpush.msra.mxu0 0.0
        %612 = vmatpush.msra.mxu0 0.0
        %613 = vmatpush.msra.mxu0 0.0
        %614 = vmatpush.msra.mxu0 0.0
        %615 = vmatpush.msra.mxu0 0.0
        %616 = vmatpush.msra.mxu0 0.0
        %617 = vmatpush.msra.mxu0 %v598
        %618 = vmatmul.f32.gmra.mxu0 %v596
        %v619 = vpop.f32.mrf.mxu0
        %v620 = vadd.f32 0.0, %v619
        %621 = vdwg.mxu0
        %622 = vmatpush.msra.mxu0 0.0
        %623 = vmatpush.msra.mxu0 0.0
        %624 = vmatpush.msra.mxu0 0.0
        %625 = vmatpush.msra.mxu0 0.0
        %626 = vmatpush.msra.mxu0 0.0
        %627 = vmatpush.msra.mxu0 0.0
        %628 = vmatpush.msra.mxu0 0.0
        %629 = vmatpush.msra.mxu0 0.0
        %630 = vmatpush.msra.mxu0 0.0
        %631 = vmatpush.msra.mxu0 0.0
        %632 = vmatpush.msra.mxu0 0.0
        %633 = vmatpush.msra.mxu0 0.0
        %634 = vmatpush.msra.mxu0 0.0
        %635 = vmatpush.msra.mxu0 0.0
        %636 = vmatpush.msra.mxu0 0.0
        %637 = vmatpush.msra.mxu0 %v600
        %638 = vmatmul.f32.gmra.mxu0 %v596
        %v639 = vpop.f32.mrf.mxu0
        %v640 = vadd.f32 0.0, %v639
        %641 = vdwg.mxu0
        %v642 = vadd.f32 %v582, %v620
        %v643 = vadd.f32 %v583, %v640
        %s644 = scalar_lea.vmem %s2, 64
        %v645 = vld [vmem:[%s644] sm:$0xff]
        %646 = vst [vmem:[#allocation1] ss:$2 sm:$0xff] %v171
        %v647 = vld.sshfl [vmem:[#allocation1] sm:$0xff pattern:$0x75316420]
        %v648 = vld.sshfl [vmem:[#allocation1 + $0x8] sm:$0xff pattern:$0x75316420]
        %649 = vrot.lane.b32.xlu0 %v647, 94
        %v650 = vpop.permute.xlu0 %649
        %651 = vrot.lane.b32.xlu0 %v648, 94
        %v652 = vpop.permute.xlu0 %651
        %vm653 = vcmask 769024
        %v654 = vsel %vm653, %v650, %v652
        %v656 = vsel %vm185, %v645, 0
        %v658 = vsel %vm189, %v654, 0
        %v660 = vsel %vm189, %v652, 0
        %662 = vmatpush.msra.mxu0 0.0
        %663 = vmatpush.msra.mxu0 0.0
        %664 = vmatpush.msra.mxu0 0.0
        %665 = vmatpush.msra.mxu0 0.0
        %666 = vmatpush.msra.mxu0 0.0
        %667 = vmatpush.msra.mxu0 0.0
        %668 = vmatpush.msra.mxu0 0.0
        %669 = vmatpush.msra.mxu0 0.0
        %670 = vmatpush.msra.mxu0 0.0
        %671 = vmatpush.msra.mxu0 0.0
        %672 = vmatpush.msra.mxu0 0.0
        %673 = vmatpush.msra.mxu0 0.0
        %674 = vmatpush.msra.mxu0 0.0
        %675 = vmatpush.msra.mxu0 0.0
        %676 = vmatpush.msra.mxu0 0.0
        %677 = vmatpush.msra.mxu0 %v658
        %678 = vmatmul.f32.gmra.mxu0 %v656
        %v679 = vpop.f32.mrf.mxu0
        %v680 = vadd.f32 0.0, %v679
        %681 = vdwg.mxu0
        %682 = vmatpush.msra.mxu0 0.0
        %683 = vmatpush.msra.mxu0 0.0
        %684 = vmatpush.msra.mxu0 0.0
        %685 = vmatpush.msra.mxu0 0.0
        %686 = vmatpush.msra.mxu0 0.0
        %687 = vmatpush.msra.mxu0 0.0
        %688 = vmatpush.msra.mxu0 0.0
        %689 = vmatpush.msra.mxu0 0.0
        %690 = vmatpush.msra.mxu0 0.0
        %691 = vmatpush.msra.mxu0 0.0
        %692 = vmatpush.msra.mxu0 0.0
        %693 = vmatpush.msra.mxu0 0.0
        %694 = vmatpush.msra.mxu0 0.0
        %695 = vmatpush.msra.mxu0 0.0
        %696 = vmatpush.msra.mxu0 0.0
        %697 = vmatpush.msra.mxu0 %v660
        %698 = vmatmul.f32.gmra.mxu0 %v656
        %v699 = vpop.f32.mrf.mxu0
        %v700 = vadd.f32 0.0, %v699
        %701 = vdwg.mxu0
        %v702 = vadd.f32 %v642, %v680
        %v703 = vadd.f32 %v643, %v700
        %v704 = vld [vmem:[%s3] sm:$0xff]
        %706 = vset.pattern.permute.xlu0 0
        %707 = vperm.xlu0 %706, %v704
        %v708 = vpop.permute.xlu0 %707
        %v710 = vadd.f32 %v702, %v708
        %v711 = vadd.f32 %v703, %v708
        %s712 = sld [smem:[#allocation3]]
        %s713 = smul.u32 %s19, 2048
        %v714 = vlaneseq
        %v715 = vshrl.u32 %v714, 7
        %v716 = vlaneseq
        %v717 = vand.u32 %v716, 127
        %v718 = vadd.s32 %v717, 128
        %v719 = vmul.u32 %v715, 256
        %v720 = vstv %s713
        %v721 = vadd.s32 %v720, %v719
        %v722 = vadd.s32 %v721, %v717
        %v723 = vadd.s32 %v721, %v718
        %s724 = smul.u32 %s712, 2654435769
        %v725 = vstv %s724
        %v726 = vxor.u32 %v722, %v725
        %v727 = vxor.u32 %v723, %v725
        %v728 = vshrl.u32 %v726, 16
        %v729 = vshrl.u32 %v727, 16
        %v730 = vxor.u32 %v726, %v728
        %v731 = vxor.u32 %v727, %v729
        %v732 = vmul.u32 %v730, 2146121005
        %v733 = vmul.u32 %v731, 2146121005
        %v734 = vshrl.u32 %v732, 15
        %v735 = vshrl.u32 %v733, 15
        %v736 = vxor.u32 %v732, %v734
        %v737 = vxor.u32 %v733, %v735
        %v738 = vmul.u32 %v736, 2221713035
        %v739 = vmul.u32 %v737, 2221713035
        %v740 = vshrl.u32 %v738, 16
        %v741 = vshrl.u32 %v739, 16
        %v742 = vxor.u32 %v738, %v740
        %v743 = vxor.u32 %v739, %v741
        %v744 = vadd.s32 %v742, 2147483648
        %vm746 = vcmp.ge.s32.totalorder %v744, 2576980378
        %v747 = vadd.s32 %v743, 2147483648
        %vm749 = vcmp.ge.s32.totalorder %v747, 2576980378
        %v750 = vsel %vm746, %v710, 0.0
        %v751 = vsel %vm749, %v711, 0.0
        %752 = vst [vmem:[%s165] sm:$0xff] %v750
        %753 = vst.msk [vmem:[%s165 + $0x8] sm:$0xff] %vm653, %v751
        %vm754 = vcmask 1048304
        %755 = vst.msk [vmem:[%s165 + $0x8] sm:$0xff] %vm754, 0.0
        %s756 = sand.u32 %s95, 1
        %s757 = scalar_lea.sflag [#allocation5], %s756
        %s758 = sand.u32 %s95, 1
        %s759 = smul.addr %s758, 16
        %s760 = scalar_lea.vmem [#allocation4], %s759
        // Predicated region
        $region33: #{tpu_custom_call.1} parent=31 // pred_check
          %p761 = pneg %p105
        $region34: #{tpu_custom_call.1} parent=31 // pred_check_branch
          %763 = sbr.rel (%p761) target = $region36
        $region35: #{tpu_custom_call.1} parent=31 // pred_region
          %765 = vsyncadd %s757, 0
          %s766 = smul.addr %s19, 2
          %s767 = smul.addr %s766, 8
          %s768 = scalar_lea.hbm %s4, %s767
          %s770 = sshll.u32 %s760, 4
          %s771 = int_to_ptr.vmem [resolvable:$true] %s770
          %s772 = sshll.u32 %s768, 4
          %s773 = int_to_ptr.hbm [resolvable:$true] %s772
          %775 = dma.vmem_to_hbm [thread:$0]  %s771, 256, %s773, %s757
        $region36: #{tpu_custom_call.1} parent=31 // pred_fallthru
          _
      $region32: #{tpu_custom_call.1} parent=5 // pred_fallthru
        _
      %p776 = scmp.le.s32.totalorder 2, %s14
      // Predicated region
      $region37: #{tpu_custom_call.1} parent=5 // pred_check
        %p777 = pneg %p776
      $region38: #{tpu_custom_call.1} parent=5 // pred_check_branch
        %779 = sbr.rel (%p777) target = $region40
      $region39: #{tpu_custom_call.1} parent=5 // pred_region
        %s780 = ssub.s32 %s14, 2
        // Predicated region
        $region41: #{tpu_custom_call.1} parent=39 // pred_check
          %p781 = pneg %p111
        $region42: #{tpu_custom_call.1} parent=39 // pred_check_branch
          %783 = sbr.rel (%p781) target = $region44
        $region43: #{tpu_custom_call.1} parent=39 // pred_region
          %s784 = sand.u32 %s96, 1
          %s785 = scalar_lea.sflag [#allocation5], %s784
          %s786 = sand.u32 %s96, 1
          %s787 = smul.addr %s786, 16
          %s788 = scalar_lea.vmem [#allocation4], %s787
          %790 = dma.done %s785, 256
        $region44: #{tpu_custom_call.1} parent=39 // pred_fallthru
          _
      $region40: #{tpu_custom_call.1} parent=5 // pred_fallthru
        _
    $region6: #{tpu_custom_call.1} parent=1 // loop_footer
      %s18 = sadd.s32 1, %s14
    $region7: #{tpu_custom_call.1} parent=1 // loop_footer_branch
      %13 = sbr.rel target = $region3
    $region8: #{tpu_custom_call.1} parent=1 // loop_exit
      _
    %791 = vsyncpa [#allocation5], 1
    %s792 = scalar_lea.sflag [#allocation5], 1
    %793 = vsyncpa %s792, 1

</llo_original>
